<compile_context>
chip_gen: v7x
topology: tpu7x:2x2x1
jax: 0.10.0
libtpu: 0.0.40
codegen_flags: <defaults>
</compile_context>

<pallas_src>
import jax
import jax.numpy as jnp
from jax.experimental import pallas as pl
from jax.experimental.pallas import tpu as pltpu

IN_DIM, H1, H2, OUT_DIM = 90, 64, 32, 3
MAX_TB = 8192          # max batch rows per grid step


def mlp_kernel(x_ref, w1_ref, b1_ref, w2_ref, b2_ref, w3_ref, b3_ref, o_ref):
    # fc1 + ReLU (f32 matmul on the MXU, f32 accumulate; bias/ReLU on the VPU
    # are free filler under the x DMA).
    h = jnp.dot(x_ref[...], w1_ref[...], preferred_element_type=jnp.float32)
    h = jnp.maximum(h + b1_ref[...], 0.0)
    # fc2 + ReLU
    h = jnp.dot(h, w2_ref[...], preferred_element_type=jnp.float32)
    h = jnp.maximum(h + b2_ref[...], 0.0)
    # fc3 (linear)
    y = jnp.dot(h, w3_ref[...], preferred_element_type=jnp.float32) + b3_ref[...]
    o_ref[...] = y.astype(o_ref.dtype)


def mlp_forward(x, params):
    """x: (B, 90) float32 -> (B, 3) float32."""
    w1, b1, w2, b2, w3, b3 = params
    B = x.shape[0]

    # Tile selection: at most MAX_TB rows per step; at least 2 steps when the
    # batch allows it (v7x megacore); tiles are a multiple of 8 sublanes and
    # balanced across steps so the last (ragged) tile isn't pathologically
    # unbalanced.
    n_steps = max(pl.cdiv(B, MAX_TB), min(2, pl.cdiv(B, 8)))
    tb = 8 * pl.cdiv(pl.cdiv(B, n_steps), 8)
    grid = (pl.cdiv(B, tb),)

    def resident(shape):
        # Same block index every grid step -> DMA'd once, stays VMEM-resident.
        return pl.BlockSpec(shape, lambda i: (0, 0))

    flops = 2 * B * (IN_DIM * H1 + H1 * H2 + H2 * OUT_DIM)
    bytes_accessed = 4 * (x.size + B * OUT_DIM
                          + w1.size + w2.size + w3.size
                          + b1.size + b2.size + b3.size)

    return pl.pallas_call(
        mlp_kernel,
        out_shape=jax.ShapeDtypeStruct((B, OUT_DIM), jnp.float32),
        grid=grid,
        in_specs=[
            # x: streamed batch tiles; last block dim == full feature width,
            # so no dead lanes are shipped over HBM.
            pl.BlockSpec((tb, IN_DIM), lambda i: (i, 0)),
            resident((IN_DIM, H1)), resident((1, H1)),         # fc1
            resident((H1, H2)), resident((1, H2)),             # fc2
            resident((H2, OUT_DIM)), resident((1, OUT_DIM)),   # fc3
        ],
        out_specs=pl.BlockSpec((tb, OUT_DIM), lambda i: (i, 0)),
        compiler_params=pltpu.CompilerParams(
            dimension_semantics=("parallel",),      # megacore split on v7x
            vmem_limit_bytes=40 * 1024 * 1024,      # ~24 MiB needed at tb=8192
        ),
        cost_estimate=pl.CostEstimate(
            flops=flops, transcendentals=0, bytes_accessed=bytes_accessed),
    )(x, w1, b1, w2, b2, w3, b3)


def init_params(key):
    """Deterministic init mimicking torch nn.Linear (uniform +/- 1/sqrt(fan_in))."""
    ks = jax.random.split(key, 6)

    def linear(kw, kb, fan_in, fan_out):
        bound = 1.0 / jnp.sqrt(fan_in)
        w = jax.random.uniform(kw, (fan_in, fan_out), jnp.float32, -bound, bound)
        b = jax.random.uniform(kb, (1, fan_out), jnp.float32, -bound, bound)
        return w, b

    w1, b1 = linear(ks[0], ks[1], IN_DIM, H1)
    w2, b2 = linear(ks[2], ks[3], H1, H2)
    w3, b3 = linear(ks[4], ks[5], H2, OUT_DIM)
    return (w1, b1, w2, b2, w3, b3)


# TODO(synk): save_weights (pickle state_dict to disk) is host-side file I/O
# with no Pallas equivalent; omitted.

if __name__ == "__main__":
    key = jax.random.PRNGKey(0)
    k_x, k_p = jax.random.split(key)

    batch = 8
    x = jax.random.normal(k_x, (batch, IN_DIM), dtype=jnp.float32)
    params = init_params(k_p)

    out = jax.block_until_ready(mlp_forward(x, params))
    assert out.shape == (batch, OUT_DIM)

    w1, b1, w2, b2, w3, b3 = params

    # Full-f32 torch-equivalent reference (kernel is f32 end to end now; the
    # tolerance only covers MXU f32-matmul pass differences vs XLA's dot).
    ref = jnp.maximum(x @ w1 + b1, 0.0)
    ref = jnp.maximum(ref @ w2 + b2, 0.0)
    ref = ref @ w3 + b3
    assert jnp.allclose(out, ref, atol=2e-2, rtol=2e-2), \
        f"max abs diff vs f32 ref: {jnp.max(jnp.abs(out - ref))}"

    print("KERNEL_OK")
</pallas_src>

<mosaic_0001>
module attributes {stable_mosaic.version = 11 : i64} {
  func.func @mlp_kernel(%arg0: i32, %arg1: memref<8x90xf32, #tpu.memory_space<vmem>>, %arg2: memref<90x64xf32, #tpu.memory_space<vmem>>, %arg3: memref<1x64xf32, #tpu.memory_space<vmem>>, %arg4: memref<64x32xf32, #tpu.memory_space<vmem>>, %arg5: memref<1x32xf32, #tpu.memory_space<vmem>>, %arg6: memref<32x3xf32, #tpu.memory_space<vmem>>, %arg7: memref<1x3xf32, #tpu.memory_space<vmem>>, %arg8: memref<8x3xf32, #tpu.memory_space<vmem>>) attributes {dimension_semantics = [#tpu.dimension_semantics<parallel>], iteration_bounds = array<i64: 1>, scalar_prefetch = 0 : i64, scratch_operands = 0 : i64, tpu.core_type = #tpu.core_type<tc>, window_params = [{transform_indices = @transform_0, window_bounds = array<i64: 8, 90>}, {pipeline_mode = #tpu.pipeline_mode<synchronous>, transform_indices = @transform_1, window_bounds = array<i64: 90, 64>}, {pipeline_mode = #tpu.pipeline_mode<synchronous>, transform_indices = @transform_2, window_bounds = array<i64: 1, 64>}, {pipeline_mode = #tpu.pipeline_mode<synchronous>, transform_indices = @transform_3, window_bounds = array<i64: 64, 32>}, {pipeline_mode = #tpu.pipeline_mode<synchronous>, transform_indices = @transform_4, window_bounds = array<i64: 1, 32>}, {pipeline_mode = #tpu.pipeline_mode<synchronous>, transform_indices = @transform_5, window_bounds = array<i64: 32, 3>}, {pipeline_mode = #tpu.pipeline_mode<synchronous>, transform_indices = @transform_6, window_bounds = array<i64: 1, 3>}, {transform_indices = @transform_7, window_bounds = array<i64: 8, 3>}]} {
    %c0 = arith.constant 0 : index
    %c0_0 = arith.constant 0 : index
    %0 = vector.load %arg1[%c0, %c0_0] : memref<8x90xf32, #tpu.memory_space<vmem>>, vector<8x90xf32>
    %c0_1 = arith.constant 0 : index
    %c0_2 = arith.constant 0 : index
    %1 = vector.load %arg2[%c0_1, %c0_2] : memref<90x64xf32, #tpu.memory_space<vmem>>, vector<90x64xf32>
    %cst = arith.constant dense<0.000000e+00> : vector<8x64xf32>
    %2 = tpu.matmul %0, %1, %cst {dimension_numbers = #tpu.dot_dimension_numbers<[1], [0], [0], [1], [0, 0, 1, 1], [], []>} : vector<8x90xf32>, vector<90x64xf32>, vector<8x64xf32> -> vector<8x64xf32>
    %c0_3 = arith.constant 0 : index
    %c0_4 = arith.constant 0 : index
    %3 = vector.load %arg3[%c0_3, %c0_4] : memref<1x64xf32, #tpu.memory_space<vmem>>, vector<1x64xf32>
    %4 = vector.broadcast %3 : vector<1x64xf32> to vector<8x64xf32>
    %5 = arith.addf %2, %4 : vector<8x64xf32>
    %cst_5 = arith.constant 0.000000e+00 : f32
    %6 = vector.broadcast %cst_5 : f32 to vector<8x64xf32>
    %7 = arith.maximumf %5, %6 : vector<8x64xf32>
    %c0_6 = arith.constant 0 : index
    %c0_7 = arith.constant 0 : index
    %8 = vector.load %arg4[%c0_6, %c0_7] : memref<64x32xf32, #tpu.memory_space<vmem>>, vector<64x32xf32>
    %cst_8 = arith.constant dense<0.000000e+00> : vector<8x32xf32>
    %9 = tpu.matmul %7, %8, %cst_8 {dimension_numbers = #tpu.dot_dimension_numbers<[1], [0], [0], [1], [0, 0, 1, 1], [], []>} : vector<8x64xf32>, vector<64x32xf32>, vector<8x32xf32> -> vector<8x32xf32>
    %c0_9 = arith.constant 0 : index
    %c0_10 = arith.constant 0 : index
    %10 = vector.load %arg5[%c0_9, %c0_10] : memref<1x32xf32, #tpu.memory_space<vmem>>, vector<1x32xf32>
    %11 = vector.broadcast %10 : vector<1x32xf32> to vector<8x32xf32>
    %12 = arith.addf %9, %11 : vector<8x32xf32>
    %cst_11 = arith.constant 0.000000e+00 : f32
    %13 = vector.broadcast %cst_11 : f32 to vector<8x32xf32>
    %14 = arith.maximumf %12, %13 : vector<8x32xf32>
    %c0_12 = arith.constant 0 : index
    %c0_13 = arith.constant 0 : index
    %15 = vector.load %arg6[%c0_12, %c0_13] : memref<32x3xf32, #tpu.memory_space<vmem>>, vector<32x3xf32>
    %cst_14 = arith.constant dense<0.000000e+00> : vector<8x3xf32>
    %16 = tpu.matmul %14, %15, %cst_14 {dimension_numbers = #tpu.dot_dimension_numbers<[1], [0], [0], [1], [0, 0, 1, 1], [], []>} : vector<8x32xf32>, vector<32x3xf32>, vector<8x3xf32> -> vector<8x3xf32>
    %c0_15 = arith.constant 0 : index
    %c0_16 = arith.constant 0 : index
    %17 = vector.load %arg7[%c0_15, %c0_16] : memref<1x3xf32, #tpu.memory_space<vmem>>, vector<1x3xf32>
    %18 = vector.broadcast %17 : vector<1x3xf32> to vector<8x3xf32>
    %19 = arith.addf %16, %18 : vector<8x3xf32>
    %c0_17 = arith.constant 0 : index
    %c0_18 = arith.constant 0 : index
    %20 = vector.load %arg8[%c0_17, %c0_18] : memref<8x3xf32, #tpu.memory_space<vmem>>, vector<8x3xf32>
    tpu.vector_store %arg8[%c0_17, %c0_18], %19 {strides = array<i32>} : memref<8x3xf32, #tpu.memory_space<vmem>>, vector<8x3xf32>,
    return
  }
  func.func @transform_0(%arg0: i32) -> (i32, i32) {
    %c0_i32 = arith.constant 0 : i32
    %c0_i32_0 = arith.constant 0 : i32
    return %arg0, %c0_i32 : i32, i32
  }
  func.func @transform_1(%arg0: i32) -> (i32, i32) {
    %c0_i32 = arith.constant 0 : i32
    %c0_i32_0 = arith.constant 0 : i32
    %c0_i32_1 = arith.constant 0 : i32
    return %c0_i32, %c0_i32_0 : i32, i32
  }
  func.func @transform_2(%arg0: i32) -> (i32, i32) {
    %c0_i32 = arith.constant 0 : i32
    %c0_i32_0 = arith.constant 0 : i32
    %c0_i32_1 = arith.constant 0 : i32
    return %c0_i32, %c0_i32_0 : i32, i32
  }
  func.func @transform_3(%arg0: i32) -> (i32, i32) {
    %c0_i32 = arith.constant 0 : i32
    %c0_i32_0 = arith.constant 0 : i32
    %c0_i32_1 = arith.constant 0 : i32
    return %c0_i32, %c0_i32_0 : i32, i32
  }
  func.func @transform_4(%arg0: i32) -> (i32, i32) {
    %c0_i32 = arith.constant 0 : i32
    %c0_i32_0 = arith.constant 0 : i32
    %c0_i32_1 = arith.constant 0 : i32
    return %c0_i32, %c0_i32_0 : i32, i32
  }
  func.func @transform_5(%arg0: i32) -> (i32, i32) {
    %c0_i32 = arith.constant 0 : i32
    %c0_i32_0 = arith.constant 0 : i32
    %c0_i32_1 = arith.constant 0 : i32
    return %c0_i32, %c0_i32_0 : i32, i32
  }
  func.func @transform_6(%arg0: i32) -> (i32, i32) {
    %c0_i32 = arith.constant 0 : i32
    %c0_i32_0 = arith.constant 0 : i32
    %c0_i32_1 = arith.constant 0 : i32
    return %c0_i32, %c0_i32_0 : i32, i32
  }
  func.func @transform_7(%arg0: i32) -> (i32, i32) {
    %c0_i32 = arith.constant 0 : i32
    %c0_i32_0 = arith.constant 0 : i32
    return %arg0, %c0_i32 : i32, i32
  }
}

</mosaic_0001>

<llo_original>
// kernel: tpu_custom_call.1
$region0: #{tpu_custom_call.1}
  #allocation0 [shape = 'u32[]', space=smem, size = 0x4, offset = 0x4, fixed_abs, tag = 'smem constant byte address 0x4 - core index']
  #allocation1 [shape = 'u32[144,128]{1,0:T(1,128)}', space=vmem, size = 0x12000, scoped, tag = 'internal scratch']
  %s0 = inlined_call_operand.vmem [shape: f32[8,90], index: 0, kind: input, shape index: {}]
  %s1 = inlined_call_operand.vmem [shape: f32[90,64], index: 1, kind: input, shape index: {}]
  %s2 = inlined_call_operand.vmem [shape: f32[1,64], index: 2, kind: input, shape index: {}]
  %s3 = inlined_call_operand.vmem [shape: f32[64,32], index: 3, kind: input, shape index: {}]
  %s4 = inlined_call_operand.vmem [shape: f32[1,32], index: 4, kind: input, shape index: {}]
  %s5 = inlined_call_operand.vmem [shape: f32[32,3], index: 5, kind: input, shape index: {}]
  %s6 = inlined_call_operand.vmem [shape: f32[1,3], index: 6, kind: input, shape index: {}]
  %s7 = inlined_call_operand.vmem [shape: f32[8,3], index: 7, kind: output, shape index: {}]
  %s8 = sld [smem:[#allocation0]]
  $region38: #{tpu_custom_call.1} parent=0
    _
  %s10 = ssub.s32 1, %s8
  %s11 = scalar_select 0, %s10, %s8
  // Predicated region
  $region2: #{tpu_custom_call.1} parent=0 // pred_check
    _
  $region3: #{tpu_custom_call.1} parent=0 // pred_check_branch
    %13 = sbr.rel (0) target = $region5
  $region4: #{tpu_custom_call.1} parent=0 // pred_region
    _
  $region5: #{tpu_custom_call.1} parent=0 // pred_fallthru
    _
  // Predicated region
  $region6: #{tpu_custom_call.1} parent=0 // pred_check
    _
  $region7: #{tpu_custom_call.1} parent=0 // pred_check_branch
    %15 = sbr.rel (0) target = $region9
  $region8: #{tpu_custom_call.1} parent=0 // pred_region
    _
  $region9: #{tpu_custom_call.1} parent=0 // pred_fallthru
    _
  // Predicated region
  $region10: #{tpu_custom_call.1} parent=0 // pred_check
    _
  $region11: #{tpu_custom_call.1} parent=0 // pred_check_branch
    %17 = sbr.rel (0) target = $region13
  $region12: #{tpu_custom_call.1} parent=0 // pred_region
    _
  $region13: #{tpu_custom_call.1} parent=0 // pred_fallthru
    _
  // Predicated region
  $region14: #{tpu_custom_call.1} parent=0 // pred_check
    _
  $region15: #{tpu_custom_call.1} parent=0 // pred_check_branch
    %19 = sbr.rel (0) target = $region17
  $region16: #{tpu_custom_call.1} parent=0 // pred_region
    _
  $region17: #{tpu_custom_call.1} parent=0 // pred_fallthru
    _
  // Predicated region
  $region18: #{tpu_custom_call.1} parent=0 // pred_check
    _
  $region19: #{tpu_custom_call.1} parent=0 // pred_check_branch
    %21 = sbr.rel (0) target = $region21
  $region20: #{tpu_custom_call.1} parent=0 // pred_region
    _
  $region21: #{tpu_custom_call.1} parent=0 // pred_fallthru
    _
  // Predicated region
  $region22: #{tpu_custom_call.1} parent=0 // pred_check
    _
  $region23: #{tpu_custom_call.1} parent=0 // pred_check_branch
    %23 = sbr.rel (0) target = $region25
  $region24: #{tpu_custom_call.1} parent=0 // pred_region
    _
  $region25: #{tpu_custom_call.1} parent=0 // pred_fallthru
    _
  // Predicated region
  $region26: #{tpu_custom_call.1} parent=0 // pred_check
    _
  $region27: #{tpu_custom_call.1} parent=0 // pred_check_branch
    %25 = sbr.rel (0) target = $region29
  $region28: #{tpu_custom_call.1} parent=0 // pred_region
    _
  $region29: #{tpu_custom_call.1} parent=0 // pred_fallthru
    _
  %v26 = vld [vmem:[%s0] sm:$0xff]
  %v27 = vld [vmem:[%s1] sm:$0xff]
  %v28 = vld [vmem:[%s1 + $0x8] sm:$0xff]
  %v29 = vld [vmem:[%s1 + $0x10] sm:$0xff]
  %v30 = vld [vmem:[%s1 + $0x18] sm:$0xff]
  %v31 = vld [vmem:[%s1 + $0x20] sm:$0xff]
  %v32 = vld [vmem:[%s1 + $0x28] sm:$0xff]
  %v33 = vld [vmem:[%s1 + $0x30] sm:$0xff]
  %v34 = vld [vmem:[%s1 + $0x38] sm:$0xff]
  %v35 = vld [vmem:[%s1 + $0x40] sm:$0xff]
  %v36 = vld [vmem:[%s1 + $0x48] sm:$0xff]
  %v37 = vld [vmem:[%s1 + $0x50] sm:$0xff]
  %v38 = vld [vmem:[%s1 + $0x58] sm:$0x3]
  %v39 = vld [vmem:[%s2] sm:$0x1]
  %v41 = vlaneseq
  %v42 = vshrl.u32 %v41, 7
  %v43 = vsub.s32 0, %v42
  %v44 = vrot.slane %v39, %v43
  %vm46 = vcmask 736256
  %v48 = vsel %vm46, %v26, 0
  %vm50 = vcmask 1041408
  %v52 = vsel %vm50, %v38, 0
  %54 = vmatprep.subr.mxu0 0.0
  %55 = vmatpush1.msra.mxu0 %v27
  %56 = vmatprep.subr.mxu0 0.0
  %57 = vmatpush1.msra.mxu0 %v28
  %58 = vmatprep.subr.mxu0 0.0
  %59 = vmatpush1.msra.mxu0 %v29
  %60 = vmatprep.subr.mxu0 0.0
  %61 = vmatpush1.msra.mxu0 %v30
  %62 = vmatprep.subr.mxu0 0.0
  %63 = vmatpush1.msra.mxu0 %v31
  %64 = vmatprep.subr.mxu0 0.0
  %65 = vmatpush1.msra.mxu0 %v32
  %66 = vmatprep.subr.mxu0 0.0
  %67 = vmatpush1.msra.mxu0 %v33
  %68 = vmatprep.subr.mxu0 0.0
  %69 = vmatpush1.msra.mxu0 %v34
  %70 = vmatprep.subr.mxu0 0.0
  %71 = vmatpush1.msra.mxu0 %v35
  %72 = vmatprep.subr.mxu0 0.0
  %73 = vmatpush1.msra.mxu0 %v36
  %74 = vmatprep.subr.mxu0 0.0
  %75 = vmatpush1.msra.mxu0 %v37
  %76 = vmatprep.subr.mxu0 0.0
  %77 = vmatpush1.msra.mxu0 %v52
  %78 = vmatprep.subr.mxu0 0.0
  %79 = vmatpush1.msra.mxu0 0.0
  %80 = vmatprep.subr.mxu0 0.0
  %81 = vmatpush1.msra.mxu0 0.0
  %82 = vmatprep.subr.mxu0 0.0
  %83 = vmatpush1.msra.mxu0 0.0
  %84 = vmatprep.subr.mxu0 0.0
  %85 = vmatpush1.msra.mxu0 0.0
  %86 = vmatprep.subr.mxu0 0.0
  %87 = vmatpush1.msra.mxu0 0.0
  %88 = vmatprep.subr.mxu0 0.0
  %89 = vmatpush1.msra.mxu0 0.0
  %90 = vmatprep.subr.mxu0 0.0
  %91 = vmatpush1.msra.mxu0 0.0
  %92 = vmatprep.subr.mxu0 0.0
  %93 = vmatpush1.msra.mxu0 0.0
  %94 = vmatprep.subr.mxu0 0.0
  %95 = vmatpush1.msra.mxu0 0.0
  %96 = vmatprep.subr.mxu0 0.0
  %97 = vmatpush1.msra.mxu0 0.0
  %98 = vmatprep.subr.mxu0 0.0
  %99 = vmatpush1.msra.mxu0 0.0
  %100 = vmatprep.subr.mxu0 0.0
  %101 = vmatpush1.msra.mxu0 0.0
  %102 = vmatprep.subr.mxu0 0.0
  %103 = vmatpush1.msra.mxu0 0.0
  %104 = vmatprep.subr.mxu0 0.0
  %105 = vmatpush1.msra.mxu0 0.0
  %106 = vmatprep.subr.mxu0 0.0
  %107 = vmatpush1.msra.mxu0 0.0
  %108 = vmatprep.subr.mxu0 0.0
  %109 = vmatpush1.msra.mxu0 0.0
  %110 = vmatprep.subr.mxu0 0.0
  %111 = vmatpush1.msra.mxu0 0.0
  %112 = vmatprep.subr.mxu0 0.0
  %113 = vmatpush1.msra.mxu0 0.0
  %114 = vmatprep.subr.mxu0 0.0
  %115 = vmatpush1.msra.mxu0 0.0
  %116 = vmatprep.subr.mxu0 0.0
  %117 = vmatpush1.msra.mxu0 0.0
  %118 = vmatprep.mubr.f32.mxu0 0.0
  %119 = vmatmul.mubr.f32.gmra.mrb[0].mxu0 %v48
  %v120 = vpop.f32.mrb[0].mxu0
  %v121 = vadd.f32 %v44, %v120
  %v122 = vpop.f32.mrb[0].mxu0
  %123 = vdwg.mxu0
  %v124 = vmax.f32 %v121, 0.0
  %v125 = vld [vmem:[%s3] sm:$0xff]
  %v126 = vld [vmem:[%s3 + $0x8] sm:$0xff]
  %v127 = vld [vmem:[%s3 + $0x10] sm:$0xff]
  %v128 = vld [vmem:[%s3 + $0x18] sm:$0xff]
  %v129 = vld [vmem:[%s3 + $0x20] sm:$0xff]
  %v130 = vld [vmem:[%s3 + $0x28] sm:$0xff]
  %v131 = vld [vmem:[%s3 + $0x30] sm:$0xff]
  %v132 = vld [vmem:[%s3 + $0x38] sm:$0xff]
  %v133 = vld [vmem:[%s4] sm:$0x1]
  %v135 = vlaneseq
  %v136 = vshrl.u32 %v135, 7
  %v137 = vsub.s32 0, %v136
  %v138 = vrot.slane %v133, %v137
  %vm140 = vcmask 523264
  %v142 = vsel %vm140, %v124, 0
  %144 = vmatprep.subr.mxu0 0.0
  %145 = vmatpush1.msra.mxu0 %v125
  %146 = vmatprep.subr.mxu0 0.0
  %147 = vmatpush1.msra.mxu0 %v126
  %148 = vmatprep.subr.mxu0 0.0
  %149 = vmatpush1.msra.mxu0 %v127
  %150 = vmatprep.subr.mxu0 0.0
  %151 = vmatpush1.msra.mxu0 %v128
  %152 = vmatprep.subr.mxu0 0.0
  %153 = vmatpush1.msra.mxu0 %v129
  %154 = vmatprep.subr.mxu0 0.0
  %155 = vmatpush1.msra.mxu0 %v130
  %156 = vmatprep.subr.mxu0 0.0
  %157 = vmatpush1.msra.mxu0 %v131
  %158 = vmatprep.subr.mxu0 0.0
  %159 = vmatpush1.msra.mxu0 %v132
  %160 = vmatprep.subr.mxu0 0.0
  %161 = vmatpush1.msra.mxu0 0.0
  %162 = vmatprep.subr.mxu0 0.0
  %163 = vmatpush1.msra.mxu0 0.0
  %164 = vmatprep.subr.mxu0 0.0
  %165 = vmatpush1.msra.mxu0 0.0
  %166 = vmatprep.subr.mxu0 0.0
  %167 = vmatpush1.msra.mxu0 0.0
  %168 = vmatprep.subr.mxu0 0.0
  %169 = vmatpush1.msra.mxu0 0.0
  %170 = vmatprep.subr.mxu0 0.0
  %171 = vmatpush1.msra.mxu0 0.0
  %172 = vmatprep.subr.mxu0 0.0
  %173 = vmatpush1.msra.mxu0 0.0
  %174 = vmatprep.subr.mxu0 0.0
  %175 = vmatpush1.msra.mxu0 0.0
  %176 = vmatprep.subr.mxu0 0.0
  %177 = vmatpush1.msra.mxu0 0.0
  %178 = vmatprep.subr.mxu0 0.0
  %179 = vmatpush1.msra.mxu0 0.0
  %180 = vmatprep.subr.mxu0 0.0
  %181 = vmatpush1.msra.mxu0 0.0
  %182 = vmatprep.subr.mxu0 0.0
  %183 = vmatpush1.msra.mxu0 0.0
  %184 = vmatprep.subr.mxu0 0.0
  %185 = vmatpush1.msra.mxu0 0.0
  %186 = vmatprep.subr.mxu0 0.0
  %187 = vmatpush1.msra.mxu0 0.0
  %188 = vmatprep.subr.mxu0 0.0
  %189 = vmatpush1.msra.mxu0 0.0
  %190 = vmatprep.subr.mxu0 0.0
  %191 = vmatpush1.msra.mxu0 0.0
  %192 = vmatprep.subr.mxu0 0.0
  %193 = vmatpush1.msra.mxu0 0.0
  %194 = vmatprep.subr.mxu0 0.0
  %195 = vmatpush1.msra.mxu0 0.0
  %196 = vmatprep.subr.mxu0 0.0
  %197 = vmatpush1.msra.mxu0 0.0
  %198 = vmatprep.subr.mxu0 0.0
  %199 = vmatpush1.msra.mxu0 0.0
  %200 = vmatprep.subr.mxu0 0.0
  %201 = vmatpush1.msra.mxu0 0.0
  %202 = vmatprep.subr.mxu0 0.0
  %203 = vmatpush1.msra.mxu0 0.0
  %204 = vmatprep.subr.mxu0 0.0
  %205 = vmatpush1.msra.mxu0 0.0
  %206 = vmatprep.subr.mxu0 0.0
  %207 = vmatpush1.msra.mxu0 0.0
  %208 = vmatprep.mubr.f32.mxu0 0.0
  %209 = vmatmul.mubr.f32.gmra.mrb[0].mxu0 %v142
  %v210 = vpop.f32.mrb[0].mxu0
  %v211 = vadd.f32 %v138, %v210
  %v212 = vpop.f32.mrb[0].mxu0
  %213 = vdwg.mxu0
  %v214 = vmax.f32 %v211, 0.0
  %v215 = vld [vmem:[%s5] sm:$0xff]
  %v216 = vld [vmem:[%s5 + $0x8] sm:$0xff]
  %v217 = vld [vmem:[%s5 + $0x10] sm:$0xff]
  %v218 = vld [vmem:[%s5 + $0x18] sm:$0xff]
  %v219 = vld [vmem:[%s6] sm:$0x1]
  %v221 = vlaneseq
  %v222 = vshrl.u32 %v221, 7
  %v223 = vsub.s32 0, %v222
  %v224 = vrot.slane %v219, %v223
  %vm226 = vcmask 261120
  %v228 = vsel %vm226, %v214, 0
  %230 = vmatprep.subr.mxu0 0.0
  %231 = vmatpush1.msra.mxu0 %v215
  %232 = vmatprep.subr.mxu0 0.0
  %233 = vmatpush1.msra.mxu0 %v216
  %234 = vmatprep.subr.mxu0 0.0
  %235 = vmatpush1.msra.mxu0 %v217
  %236 = vmatprep.subr.mxu0 0.0
  %237 = vmatpush1.msra.mxu0 %v218
  %238 = vmatprep.subr.mxu0 0.0
  %239 = vmatpush1.msra.mxu0 0.0
  %240 = vmatprep.subr.mxu0 0.0
  %241 = vmatpush1.msra.mxu0 0.0
  %242 = vmatprep.subr.mxu0 0.0
  %243 = vmatpush1.msra.mxu0 0.0
  %244 = vmatprep.subr.mxu0 0.0
  %245 = vmatpush1.msra.mxu0 0.0
  %246 = vmatprep.subr.mxu0 0.0
  %247 = vmatpush1.msra.mxu0 0.0
  %248 = vmatprep.subr.mxu0 0.0
  %249 = vmatpush1.msra.mxu0 0.0
  %250 = vmatprep.subr.mxu0 0.0
  %251 = vmatpush1.msra.mxu0 0.0
  %252 = vmatprep.subr.mxu0 0.0
  %253 = vmatpush1.msra.mxu0 0.0
  %254 = vmatprep.subr.mxu0 0.0
  %255 = vmatpush1.msra.mxu0 0.0
  %256 = vmatprep.subr.mxu0 0.0
  %257 = vmatpush1.msra.mxu0 0.0
  %258 = vmatprep.subr.mxu0 0.0
  %259 = vmatpush1.msra.mxu0 0.0
  %260 = vmatprep.subr.mxu0 0.0
  %261 = vmatpush1.msra.mxu0 0.0
  %262 = vmatprep.subr.mxu0 0.0
  %263 = vmatpush1.msra.mxu0 0.0
  %264 = vmatprep.subr.mxu0 0.0
  %265 = vmatpush1.msra.mxu0 0.0
  %266 = vmatprep.subr.mxu0 0.0
  %267 = vmatpush1.msra.mxu0 0.0
  %268 = vmatprep.subr.mxu0 0.0
  %269 = vmatpush1.msra.mxu0 0.0
  %270 = vmatprep.subr.mxu0 0.0
  %271 = vmatpush1.msra.mxu0 0.0
  %272 = vmatprep.subr.mxu0 0.0
  %273 = vmatpush1.msra.mxu0 0.0
  %274 = vmatprep.subr.mxu0 0.0
  %275 = vmatpush1.msra.mxu0 0.0
  %276 = vmatprep.subr.mxu0 0.0
  %277 = vmatpush1.msra.mxu0 0.0
  %278 = vmatprep.subr.mxu0 0.0
  %279 = vmatpush1.msra.mxu0 0.0
  %280 = vmatprep.subr.mxu0 0.0
  %281 = vmatpush1.msra.mxu0 0.0
  %282 = vmatprep.subr.mxu0 0.0
  %283 = vmatpush1.msra.mxu0 0.0
  %284 = vmatprep.subr.mxu0 0.0
  %285 = vmatpush1.msra.mxu0 0.0
  %286 = vmatprep.subr.mxu0 0.0
  %287 = vmatpush1.msra.mxu0 0.0
  %288 = vmatprep.subr.mxu0 0.0
  %289 = vmatpush1.msra.mxu0 0.0
  %290 = vmatprep.subr.mxu0 0.0
  %291 = vmatpush1.msra.mxu0 0.0
  %292 = vmatprep.subr.mxu0 0.0
  %293 = vmatpush1.msra.mxu0 0.0
  %294 = vmatprep.mubr.f32.mxu0 0.0
  %295 = vmatmul.mubr.f32.gmra.mrb[0].mxu0 %v228
  %v296 = vpop.f32.mrb[0].mxu0
  %v297 = vadd.f32 %v224, %v296
  %v298 = vpop.f32.mrb[0].mxu0
  %299 = vdwg.mxu0
  %vm300 = vcmask 23552
  %301 = vst.msk [vmem:[%s7] sm:$0xff] %vm300, %v297
  // Predicated region
  $region30: #{tpu_custom_call.1} parent=0 // pred_check
    _
  $region31: #{tpu_custom_call.1} parent=0 // pred_check_branch
    %303 = sbr.rel (0) target = $region33
  $region32: #{tpu_custom_call.1} parent=0 // pred_region
    _
  $region33: #{tpu_custom_call.1} parent=0 // pred_fallthru
    _
  // Predicated region
  $region34: #{tpu_custom_call.1} parent=0 // pred_check
    _
  $region35: #{tpu_custom_call.1} parent=0 // pred_check_branch
    %305 = sbr.rel (0) target = $region37
  $region36: #{tpu_custom_call.1} parent=0 // pred_region
    _
  $region37: #{tpu_custom_call.1} parent=0 // pred_fallthru
    _

</llo_original>
